<compile_context>
chip_gen: v6e
topology: v6e:2x2x1
jax: 0.10.0
libtpu: 0.0.40
codegen_flags: <defaults>
</compile_context>

<pallas_src>
import functools

import jax
import jax.numpy as jnp
from jax import lax
from jax.experimental import pallas as pl
from jax.experimental.pallas import tpu as pltpu

# ---- module hyper-parameters (from the PyTorch source) ----------------------
N_EMBD = 64          # n_embd
NUM_HEADS = 4        # num_heads
HEAD_SIZE = 16       # head_size  (num_heads * head_size == n_embd)
BLOCK_SIZE = 256     # causal-mask buffer size (we only need T <= BLOCK_SIZE)

ROW_BUDGET = 1024    # target rows (bb*T) of MXU work per grid step


def _mha_kernel(x_ref, wqkv_ref, wpt_ref, bp_ref, o_ref, *, num_heads):
    """One batch-block per grid step; all heads fused and batched inside.

    x_ref    : (bb, T, C)   VMEM, f32
    wqkv_ref : (C, 3*C)     VMEM, bf16; columns = [Q heads | K heads | V heads],
                            Q columns pre-scaled by C**-0.5 in the wrapper.
    wpt_ref  : (C, C)       VMEM, bf16 (output projection, already transposed)
    bp_ref   : (1, C)       VMEM, f32  (output projection bias)
    o_ref    : (bb, T, C)   VMEM, f32
    """
    bb, T, C = x_ref.shape
    H = num_heads
    hs = C // H

    # ---- fused QKV projection: one bf16 MXU matmul with f32 accumulation ----
    x2 = x_ref[...].reshape(bb * T, C).astype(jnp.bfloat16)
    qkv = jnp.dot(x2, wqkv_ref[...], preferred_element_type=jnp.float32)  # (bb*T, 3C) f32
    qkv = qkv.astype(jnp.bfloat16)          # single cast; halves live VMEM
    qkv = qkv.reshape(bb, T, 3 * C)

    # Stack heads along the einsum batch axis: (H*bb, T, hs) with leading
    # index h*bb + b.  Leading-axis concat is cheap (no lane movement).
    q = jnp.concatenate([qkv[:, :, h * hs:(h + 1) * hs] for h in range(H)], axis=0)
    k = jnp.concatenate([qkv[:, :, C + h * hs:C + (h + 1) * hs] for h in range(H)], axis=0)
    v = jnp.concatenate([qkv[:, :, 2 * C + h * hs:2 * C + (h + 1) * hs] for h in range(H)], axis=0)

    # Additive causal bias, computed once per grid step (big finite negative so
    # low-precision downstream paths stay NaN-free; diagonal is never masked).
    row = lax.broadcasted_iota(jnp.int32, (T, T), 0)
    col = lax.broadcasted_iota(jnp.int32, (T, T), 1)
    mask_bias = jnp.where(col <= row, jnp.float32(0.0), jnp.float32(-1e30))  # (T, T)

    # q @ k^T for ALL heads in one batched matmul (contracts the hs axis of
    # both operands — no explicit transpose).  Scale already in Q weights.
    wei = jnp.einsum('bqd,bkd->bqk', q, k,
                     preferred_element_type=jnp.float32)                # (H*bb, T, T) f32
    wei = wei + mask_bias[None, :, :]

    # Open-coded softmax in f32: exp -> EUP, approx reciprocal -> EUP.
    m = jnp.max(wei, axis=-1, keepdims=True)
    p = jnp.exp(wei - m)
    s = jnp.sum(p, axis=-1, keepdims=True)
    p = p * pl.reciprocal(s, approx=True)
    # dropout(p=0.0) is the identity

    out = jnp.einsum('bqk,bkd->bqd', p.astype(jnp.bfloat16), v,
                     preferred_element_type=jnp.float32)                # (H*bb, T, hs) f32
    out = out.astype(jnp.bfloat16)

    # Re-assemble heads along the channel axis: (bb, T, C).
    out_c = jnp.concatenate([out[h * bb:(h + 1) * bb] for h in range(H)], axis=-1)

    # ---- fused output projection: one (bb*T, C) @ (C, C) matmul + bias ------
    out2 = out_c.reshape(bb * T, C)
    y = jnp.dot(out2, wpt_ref[...], preferred_element_type=jnp.float32)  # (bb*T, C) f32
    y = y + bp_ref[...].astype(jnp.float32)
    o_ref[...] = y.reshape(bb, T, C).astype(o_ref.dtype)


def _pick_bb(B, T, row_budget=ROW_BUDGET):
    """Largest batch-block with bb*T <= row_budget, preferring grid length >= 2
    (so the parallel axis can shard across the two TensorCores on v7x)."""
    divisors = [d for d in range(1, B + 1) if B % d == 0]
    ok = [d for d in divisors if d * T <= row_budget]
    if not ok:
        return 1
    multi = [d for d in ok if B // d >= 2]
    return max(multi) if multi else max(ok)


def multi_head_attention(x, wq, wk, wv, wp, bp):
    """x: (B, T, C) float32.  wq/wk/wv: (H, C, hs) (i.e. head.weight.T stacked).
    wp: (C, C) [out, in] like nn.Linear.weight.  bp: (C,).  Returns (B, T, C)."""
    B, T, C = x.shape
    H, _, hs = wq.shape
    assert H * hs == C

    # Stack the per-head projection weights into one (C, 3*C) bf16 matrix so
    # the kernel does a single QKV matmul; fold the 1/sqrt(C) softmax scale
    # into the Q columns (exact in bf16 for C a power of two).
    scale = C ** (-0.5)   # NOTE: PyTorch reference scales by n_embd (C), not head_size
    wq2 = (jnp.transpose(wq, (1, 0, 2)).reshape(C, H * hs) * scale)
    wk2 = jnp.transpose(wk, (1, 0, 2)).reshape(C, H * hs)
    wv2 = jnp.transpose(wv, (1, 0, 2)).reshape(C, H * hs)
    wqkv = jnp.concatenate([wq2, wk2, wv2], axis=-1).astype(jnp.bfloat16)    # (C, 3C)
    wpt = wp.T.astype(jnp.bfloat16)                                          # (C, C)
    bp2 = bp.reshape(1, C).astype(jnp.float32)

    bb = _pick_bb(B, T)
    grid = (B // bb,)

    # Advisory cost estimate (QKV + QK^T + PV + proj; exp + approx reciprocal).
    flops = 2 * B * T * C * (3 * C) + 4 * B * T * T * C + 2 * B * T * C * C
    transcendentals = B * H * T * T + B * H * T
    bytes_accessed = (2 * B * T * C * 4            # x in + out, f32
                      + (C * 3 * C + C * C) * 2    # bf16 weights
                      + C * 4)                     # bias

    kernel = functools.partial(_mha_kernel, num_heads=H)
    return pl.pallas_call(
        kernel,
        out_shape=jax.ShapeDtypeStruct((B, T, C), x.dtype),
        grid=grid,
        in_specs=[
            pl.BlockSpec((bb, T, C), lambda b: (b, 0, 0)),
            pl.BlockSpec((C, 3 * C), lambda b: (0, 0)),
            pl.BlockSpec((C, C), lambda b: (0, 0)),
            pl.BlockSpec((1, C), lambda b: (0, 0)),
        ],
        out_specs=pl.BlockSpec((bb, T, C), lambda b: (b, 0, 0)),
        compiler_params=pltpu.CompilerParams(
            dimension_semantics=("parallel",),
            vmem_limit_bytes=48 * 1024 * 1024),
        cost_estimate=pl.CostEstimate(
            flops=flops,
            transcendentals=transcendentals,
            bytes_accessed=bytes_accessed),
    )(x, wqkv, wpt, bp2)


def _reference(x, wq, wk, wv, wp, bp):
    """Plain-JAX f32 reference mirroring the PyTorch forward exactly."""
    B, T, C = x.shape
    H, _, hs = wq.shape
    outs = []
    for h in range(H):
        q = x @ wq[h]                                  # (B, T, hs)
        k = x @ wk[h]
        v = x @ wv[h]
        wei = (q @ jnp.swapaxes(k, -2, -1)) * C ** (-0.5)
        mask = jnp.tril(jnp.ones((T, T), dtype=bool))
        wei = jnp.where(mask, wei, -jnp.inf)
        wei = jax.nn.softmax(wei, axis=-1)
        outs.append(wei @ v)
    out = jnp.concatenate(outs, axis=-1)               # (B, T, C)
    return out @ wp.T + bp


if __name__ == "__main__":
    key = jax.random.PRNGKey(0)
    kx, kq, kk, kv, kp, kb = jax.random.split(key, 6)

    B, T = 2, 8                                        # T <= block_size (256)
    C, H, hs = N_EMBD, NUM_HEADS, HEAD_SIZE

    x = jax.random.normal(kx, (B, T, C), dtype=jnp.float32)
    wq = 0.02 * jax.random.normal(kq, (H, C, hs), dtype=jnp.float32)
    wk = 0.02 * jax.random.normal(kk, (H, C, hs), dtype=jnp.float32)
    wv = 0.02 * jax.random.normal(kv, (H, C, hs), dtype=jnp.float32)
    wp = 0.02 * jax.random.normal(kp, (C, C), dtype=jnp.float32)   # nn.Linear weight [out, in]
    bp = 0.01 * jax.random.normal(kb, (C,), dtype=jnp.float32)

    out = multi_head_attention(x, wq, wk, wv, wp, bp)
    out = jax.block_until_ready(out)

    ref = _reference(x, wq, wk, wv, wp, bp)
    assert out.shape == (B, T, C)
    # bf16 MXU operands (f32 accumulate) + approx reciprocal: loosened tolerance
    # vs the pure-f32 reference.
    assert jnp.allclose(out, ref, atol=2e-2, rtol=2e-2), "mismatch vs reference"

    print("KERNEL_OK")
</pallas_src>

<mosaic_0001>
module attributes {stable_mosaic.version = 11 : i64} {
  func.func @_mha_kernel(%arg0: i32, %arg1: memref<1x8x64xf32, #tpu.memory_space<vmem>>, %arg2: memref<64x192xbf16, #tpu.memory_space<vmem>>, %arg3: memref<64x64xbf16, #tpu.memory_space<vmem>>, %arg4: memref<1x64xf32, #tpu.memory_space<vmem>>, %arg5: memref<1x8x64xf32, #tpu.memory_space<vmem>>) attributes {dimension_semantics = [#tpu.dimension_semantics<parallel>], iteration_bounds = array<i64: 2>, scalar_prefetch = 0 : i64, scratch_operands = 0 : i64, tpu.core_type = #tpu.core_type<tc>, window_params = [{transform_indices = @transform_0, window_bounds = array<i64: 1, 8, 64>}, {pipeline_mode = #tpu.pipeline_mode<synchronous>, transform_indices = @transform_1, window_bounds = array<i64: 64, 192>}, {pipeline_mode = #tpu.pipeline_mode<synchronous>, transform_indices = @transform_2, window_bounds = array<i64: 64, 64>}, {pipeline_mode = #tpu.pipeline_mode<synchronous>, transform_indices = @transform_3, window_bounds = array<i64: 1, 64>}, {transform_indices = @transform_4, window_bounds = array<i64: 1, 8, 64>}]} {
    %c0 = arith.constant 0 : index
    %c0_0 = arith.constant 0 : index
    %c0_1 = arith.constant 0 : index
    %0 = vector.load %arg1[%c0, %c0_0, %c0_1] : memref<1x8x64xf32, #tpu.memory_space<vmem>>, vector<1x8x64xf32>
    %1 = vector.shape_cast %0 : vector<1x8x64xf32> to vector<8x64xf32>
    %2 = arith.truncf %1 : vector<8x64xf32> to vector<8x64xbf16>
    %c0_2 = arith.constant 0 : index
    %c0_3 = arith.constant 0 : index
    %3 = vector.load %arg2[%c0_2, %c0_3] : memref<64x192xbf16, #tpu.memory_space<vmem>>, vector<64x192xbf16>
    %cst = arith.constant dense<0.000000e+00> : vector<8x192xf32>
    %4 = tpu.matmul %2, %3, %cst {dimension_numbers = #tpu.dot_dimension_numbers<[1], [0], [0], [1], [0, 0, 1, 1], [], []>} : vector<8x64xbf16>, vector<64x192xbf16>, vector<8x192xf32> -> vector<8x192xf32>
    %5 = arith.truncf %4 : vector<8x192xf32> to vector<8x192xbf16>
    %6 = vector.shape_cast %5 : vector<8x192xbf16> to vector<1x8x192xbf16>
    %7 = vector.extract_strided_slice %6 {offsets = [0, 0, 0], sizes = [1, 8, 16], strides = [1, 1, 1]} : vector<1x8x192xbf16> to vector<1x8x16xbf16>
    %8 = vector.extract_strided_slice %6 {offsets = [0, 0, 16], sizes = [1, 8, 16], strides = [1, 1, 1]} : vector<1x8x192xbf16> to vector<1x8x16xbf16>
    %9 = vector.extract_strided_slice %6 {offsets = [0, 0, 32], sizes = [1, 8, 16], strides = [1, 1, 1]} : vector<1x8x192xbf16> to vector<1x8x16xbf16>
    %10 = vector.extract_strided_slice %6 {offsets = [0, 0, 48], sizes = [1, 8, 16], strides = [1, 1, 1]} : vector<1x8x192xbf16> to vector<1x8x16xbf16>
    %11 = tpu.concatenate %7, %8, %9, %10 in 0 : vector<1x8x16xbf16>, vector<1x8x16xbf16>, vector<1x8x16xbf16>, vector<1x8x16xbf16> -> vector<4x8x16xbf16>
    %12 = vector.extract_strided_slice %6 {offsets = [0, 0, 64], sizes = [1, 8, 16], strides = [1, 1, 1]} : vector<1x8x192xbf16> to vector<1x8x16xbf16>
    %13 = vector.extract_strided_slice %6 {offsets = [0, 0, 80], sizes = [1, 8, 16], strides = [1, 1, 1]} : vector<1x8x192xbf16> to vector<1x8x16xbf16>
    %14 = vector.extract_strided_slice %6 {offsets = [0, 0, 96], sizes = [1, 8, 16], strides = [1, 1, 1]} : vector<1x8x192xbf16> to vector<1x8x16xbf16>
    %15 = vector.extract_strided_slice %6 {offsets = [0, 0, 112], sizes = [1, 8, 16], strides = [1, 1, 1]} : vector<1x8x192xbf16> to vector<1x8x16xbf16>
    %16 = tpu.concatenate %12, %13, %14, %15 in 0 : vector<1x8x16xbf16>, vector<1x8x16xbf16>, vector<1x8x16xbf16>, vector<1x8x16xbf16> -> vector<4x8x16xbf16>
    %17 = vector.extract_strided_slice %6 {offsets = [0, 0, 128], sizes = [1, 8, 16], strides = [1, 1, 1]} : vector<1x8x192xbf16> to vector<1x8x16xbf16>
    %18 = vector.extract_strided_slice %6 {offsets = [0, 0, 144], sizes = [1, 8, 16], strides = [1, 1, 1]} : vector<1x8x192xbf16> to vector<1x8x16xbf16>
    %19 = vector.extract_strided_slice %6 {offsets = [0, 0, 160], sizes = [1, 8, 16], strides = [1, 1, 1]} : vector<1x8x192xbf16> to vector<1x8x16xbf16>
    %20 = vector.extract_strided_slice %6 {offsets = [0, 0, 176], sizes = [1, 8, 16], strides = [1, 1, 1]} : vector<1x8x192xbf16> to vector<1x8x16xbf16>
    %21 = tpu.concatenate %17, %18, %19, %20 in 0 : vector<1x8x16xbf16>, vector<1x8x16xbf16>, vector<1x8x16xbf16>, vector<1x8x16xbf16> -> vector<4x8x16xbf16>
    %22 = tpu.iota {dimensions = array<i32: 0>} : vector<8x8xi32>
    %23 = tpu.iota {dimensions = array<i32: 1>} : vector<8x8xi32>
    %24 = arith.cmpi sle, %23, %22 : vector<8x8xi32>
    %cst_4 = arith.constant 0.000000e+00 : f32
    %cst_5 = arith.constant -1.000000e+30 : f32
    %25 = vector.broadcast %cst_4 : f32 to vector<8x8xf32>
    %26 = vector.broadcast %cst_5 : f32 to vector<8x8xf32>
    %27 = arith.select %24, %25, %26 : vector<8x8xi1>, vector<8x8xf32>
    "tpu.trace_start"() <{level = 10 : i32, message = "bqd,bkd->bqk"}> : () -> ()
    %cst_6 = arith.constant dense<0.000000e+00> : vector<4x8x8xf32>
    %28 = tpu.matmul %11, %16, %cst_6 {dimension_numbers = #tpu.dot_dimension_numbers<[2], [2], [1], [1], [0, 0, 0, 1, 1, 1], [0], [0]>} : vector<4x8x16xbf16>, vector<4x8x16xbf16>, vector<4x8x8xf32> -> vector<4x8x8xf32>
    "tpu.trace_stop"() : () -> ()
    %29 = vector.shape_cast %27 : vector<8x8xf32> to vector<1x8x8xf32>
    %30 = vector.broadcast %29 : vector<1x8x8xf32> to vector<4x8x8xf32>
    %31 = arith.addf %28, %30 : vector<4x8x8xf32>
    %cst_7 = arith.constant dense<0xFF800000> : vector<4x8xf32>
    %32 = vector.multi_reduction <maximumf>, %31, %cst_7 [2] : vector<4x8x8xf32> to vector<4x8xf32>
    %33 = vector.shape_cast %32 : vector<4x8xf32> to vector<4x8x1xf32>
    %34 = vector.broadcast %33 : vector<4x8x1xf32> to vector<4x8x8xf32>
    %35 = arith.subf %31, %34 : vector<4x8x8xf32>
    %36 = math.exp %35 : vector<4x8x8xf32>
    %cst_8 = arith.constant dense<0.000000e+00> : vector<4x8xf32>
    %37 = vector.multi_reduction <add>, %36, %cst_8 [2] : vector<4x8x8xf32> to vector<4x8xf32>
    %38 = vector.shape_cast %37 : vector<4x8xf32> to vector<4x8x1xf32>
    %39 = tpu.reciprocal %38 {approx = true} : vector<4x8x1xf32> -> vector<4x8x1xf32>
    %40 = vector.broadcast %39 : vector<4x8x1xf32> to vector<4x8x8xf32>
    %41 = arith.mulf %36, %40 : vector<4x8x8xf32>
    %42 = arith.truncf %41 : vector<4x8x8xf32> to vector<4x8x8xbf16>
    "tpu.trace_start"() <{level = 10 : i32, message = "bqk,bkd->bqd"}> : () -> ()
    %cst_9 = arith.constant dense<0.000000e+00> : vector<4x8x16xf32>
    %43 = tpu.matmul %42, %21, %cst_9 {dimension_numbers = #tpu.dot_dimension_numbers<[2], [1], [1], [2], [0, 0, 0, 1, 1, 2], [0], [0]>} : vector<4x8x8xbf16>, vector<4x8x16xbf16>, vector<4x8x16xf32> -> vector<4x8x16xf32>
    "tpu.trace_stop"() : () -> ()
    %44 = arith.truncf %43 : vector<4x8x16xf32> to vector<4x8x16xbf16>
    %45 = vector.extract_strided_slice %44 {offsets = [0, 0, 0], sizes = [1, 8, 16], strides = [1, 1, 1]} : vector<4x8x16xbf16> to vector<1x8x16xbf16>
    %46 = vector.extract_strided_slice %44 {offsets = [1, 0, 0], sizes = [1, 8, 16], strides = [1, 1, 1]} : vector<4x8x16xbf16> to vector<1x8x16xbf16>
    %47 = vector.extract_strided_slice %44 {offsets = [2, 0, 0], sizes = [1, 8, 16], strides = [1, 1, 1]} : vector<4x8x16xbf16> to vector<1x8x16xbf16>
    %48 = vector.extract_strided_slice %44 {offsets = [3, 0, 0], sizes = [1, 8, 16], strides = [1, 1, 1]} : vector<4x8x16xbf16> to vector<1x8x16xbf16>
    %49 = tpu.concatenate %45, %46, %47, %48 in 2 : vector<1x8x16xbf16>, vector<1x8x16xbf16>, vector<1x8x16xbf16>, vector<1x8x16xbf16> -> vector<1x8x64xbf16>
    %50 = vector.shape_cast %49 : vector<1x8x64xbf16> to vector<8x64xbf16>
    %c0_10 = arith.constant 0 : index
    %c0_11 = arith.constant 0 : index
    %51 = vector.load %arg3[%c0_10, %c0_11] : memref<64x64xbf16, #tpu.memory_space<vmem>>, vector<64x64xbf16>
    %cst_12 = arith.constant dense<0.000000e+00> : vector<8x64xf32>
    %52 = tpu.matmul %50, %51, %cst_12 {dimension_numbers = #tpu.dot_dimension_numbers<[1], [0], [0], [1], [0, 0, 1, 1], [], []>} : vector<8x64xbf16>, vector<64x64xbf16>, vector<8x64xf32> -> vector<8x64xf32>
    %c0_13 = arith.constant 0 : index
    %c0_14 = arith.constant 0 : index
    %53 = vector.load %arg4[%c0_13, %c0_14] : memref<1x64xf32, #tpu.memory_space<vmem>>, vector<1x64xf32>
    %54 = vector.broadcast %53 : vector<1x64xf32> to vector<8x64xf32>
    %55 = arith.addf %52, %54 : vector<8x64xf32>
    %56 = vector.shape_cast %55 : vector<8x64xf32> to vector<1x8x64xf32>
    %c0_15 = arith.constant 0 : index
    %c0_16 = arith.constant 0 : index
    %c0_17 = arith.constant 0 : index
    %57 = vector.load %arg5[%c0_15, %c0_16, %c0_17] : memref<1x8x64xf32, #tpu.memory_space<vmem>>, vector<1x8x64xf32>
    tpu.vector_store %arg5[%c0_15, %c0_16, %c0_17], %56 {strides = array<i32>} : memref<1x8x64xf32, #tpu.memory_space<vmem>>, vector<1x8x64xf32>,
    return
  }
  func.func @transform_0(%arg0: i32) -> (i32, i32, i32) {
    %c0_i32 = arith.constant 0 : i32
    %c0_i32_0 = arith.constant 0 : i32
    %c0_i32_1 = arith.constant 0 : i32
    return %arg0, %c0_i32, %c0_i32_0 : i32, i32, i32
  }
  func.func @transform_1(%arg0: i32) -> (i32, i32) {
    %c0_i32 = arith.constant 0 : i32
    %c0_i32_0 = arith.constant 0 : i32
    %c0_i32_1 = arith.constant 0 : i32
    return %c0_i32, %c0_i32_0 : i32, i32
  }
  func.func @transform_2(%arg0: i32) -> (i32, i32) {
    %c0_i32 = arith.constant 0 : i32
    %c0_i32_0 = arith.constant 0 : i32
    %c0_i32_1 = arith.constant 0 : i32
    return %c0_i32, %c0_i32_0 : i32, i32
  }
  func.func @transform_3(%arg0: i32) -> (i32, i32) {
    %c0_i32 = arith.constant 0 : i32
    %c0_i32_0 = arith.constant 0 : i32
    %c0_i32_1 = arith.constant 0 : i32
    return %c0_i32, %c0_i32_0 : i32, i32
  }
  func.func @transform_4(%arg0: i32) -> (i32, i32, i32) {
    %c0_i32 = arith.constant 0 : i32
    %c0_i32_0 = arith.constant 0 : i32
    %c0_i32_1 = arith.constant 0 : i32
    return %arg0, %c0_i32, %c0_i32_0 : i32, i32, i32
  }
}

</mosaic_0001>

<llo_original>
// kernel: tpu_custom_call.1
$region0: #{tpu_custom_call.1}
  #allocation0 [shape = 'u32[]', space=smem, size = 0x4, offset = 0x4, fixed_abs, tag = 'smem constant byte address 0x4 - core index']
  #allocation1 [shape = 'u32[144,128]{1,0:T(1,128)}', space=vmem, size = 0x12000, scoped, tag = 'internal scratch']
  %s0 = inlined_call_operand.hbm [shape: f32[2,8,64], index: 0, kind: input, shape index: {}]
  %s1 = inlined_call_operand.hbm [shape: bf16[64,192], index: 1, kind: input, shape index: {}]
  %s2 = inlined_call_operand.hbm [shape: bf16[64,64], index: 2, kind: input, shape index: {}]
  %s3 = inlined_call_operand.vmem [shape: f32[1,64], index: 3, kind: input, shape index: {}]
  %s4 = inlined_call_operand.hbm [shape: f32[2,8,64], index: 4, kind: output, shape index: {}]
  %s5 = sld [smem:[#allocation0]]
  $region61: #{tpu_custom_call.1} parent=0
    _
  %s7 = ssub.s32 1, %s5
  %s8 = scalar_select 0, %s7, %s5
  $region1: #{tpu_custom_call.1} parent=0
    #allocation2 [shape = 'u8[8192]{0}', space=vmem, size = 0x2000, scoped, tag = 'input window, operand 0']
    #allocation3 [shape = 's32[2]{0}', space=sflag, size = 0x8, scoped, tag = 'scoped memory for tpu_custom_call.1']
    #allocation4 [shape = 's32[2]{0}', space=sflag, size = 0x8, scoped, tag = 'scoped memory for tpu_custom_call.1']
    #allocation5 [shape = 'u8[32768]{0}', space=vmem, size = 0x8000, scoped, tag = 'input window, operand 1, single buffered']
    #allocation6 [shape = 's32[1]{0}', space=sflag, size = 0x4, scoped, tag = 'scoped memory for tpu_custom_call.1']
    #allocation7 [shape = 'u8[16384]{0}', space=vmem, size = 0x4000, scoped, tag = 'input window, operand 2, single buffered']
    #allocation8 [shape = 'u8[8192]{0}', space=vmem, size = 0x2000, scoped, tag = 'output window, operand 0']
    %9 = vsyncpa [#allocation3], 0
    %s10 = scalar_lea.sflag [#allocation3], 1
    %11 = vsyncpa %s10, 0
    %12 = vsyncpa [#allocation6], 0
    %13 = vsyncpa [#allocation4], 0
    %s14 = scalar_lea.sflag [#allocation4], 1
    %15 = vsyncpa %s14, 0
    loop: start=0, step=1, limit=4
    $region2: #{tpu_custom_call.1} parent=1 // loop_pre_header
      _
    $region3: #{tpu_custom_call.1} parent=1 // loop_header
      %s17 = sphi 0, %s21
      %p18 = scmp.ge.s32.totalorder %s17, 4
      %s27 = sphi 0, %s29
      %s30 = sphi 0, %s27
      %s31 = sphi 0, %s30
      %s47 = sphi 0, %s31
      %s51 = sphi 0, %s51
      %s53 = sphi 0, %s51
      %s54 = sphi 0, %s53
      %s68 = sphi 0, %s54
      %s72 = sphi 0, %s72
      %s74 = sphi 0, %s72
      %s75 = sphi 0, %s74
      %s89 = sphi 0, %s75
      %s93 = sphi 0, %s93
      %s95 = sphi 0, %s93
      %s96 = sphi 0, %s95
      %s110 = sphi 0, %s96
      %s116 = sphi 0, %s118
      %s119 = sphi 0, %s116
      %s120 = sphi 0, %s119
      %s136 = sphi 0, %s120
    $region4: #{tpu_custom_call.1} parent=1 // loop_header_branch
      %20 = sbr.rel (%p18) target = $region8
    $region5: #{tpu_custom_call.1} parent=1 // loop_body
      %s22 = ssub.s32 %s17, 1
      %s23 = ssub.s32 %s17, 2
      %s24 = sadd.s32 %s17, 1
      %s25 = ssub.s32 %s17, %s24
      %p26 = scmp.eq.s32.totalorder %s25, 0
      %s28 = sadd.s32 %s27, 1
      %s29 = scalar_select %p26, %s27, %s28
      %p32 = pneg %p26
      %p33 = scmp.eq.s32.totalorder %s17, 1
      %p34 = por %p32, %p33
      %p35 = scmp.ne.s32.totalorder %s27, %s30
      %p36 = scmp.eq.s32.totalorder %s17, 0
      %p37 = por %p35, %p36
      %p38 = scmp.ne.s32.totalorder %s27, %s30
      %p39 = scmp.eq.s32.totalorder %s22, 1
      %p40 = por %p38, %p39
      %p41 = scmp.ne.s32.totalorder %s30, %s31
      %p42 = scmp.eq.s32.totalorder %s22, 0
      %p43 = por %p41, %p42
      %p44 = scmp.ne.s32.totalorder %s30, %s31
      %p45 = scmp.eq.s32.totalorder %s23, 1
      %p46 = por %p44, %p45
      %p48 = scmp.ne.s32.totalorder %s31, %s47
      %p49 = scmp.eq.s32.totalorder %s23, 0
      %p50 = por %p48, %p49
      %s52 = sadd.s32 %s51, 1
      %p55 = scmp.eq.s32.totalorder %s17, 1
      %p56 = scmp.ne.s32.totalorder %s51, %s53
      %p57 = scmp.eq.s32.totalorder %s17, 0
      %p58 = por %p56, %p57
      %p59 = scmp.ne.s32.totalorder %s51, %s53
      %p60 = scmp.eq.s32.totalorder %s22, 1
      %p61 = por %p59, %p60
      %p62 = scmp.ne.s32.totalorder %s53, %s54
      %p63 = scmp.eq.s32.totalorder %s22, 0
      %p64 = por %p62, %p63
      %p65 = scmp.ne.s32.totalorder %s53, %s54
      %p66 = scmp.eq.s32.totalorder %s23, 1
      %p67 = por %p65, %p66
      %p69 = scmp.ne.s32.totalorder %s54, %s68
      %p70 = scmp.eq.s32.totalorder %s23, 0
      %p71 = por %p69, %p70
      %s73 = sadd.s32 %s72, 1
      %p76 = scmp.eq.s32.totalorder %s17, 1
      %p77 = scmp.ne.s32.totalorder %s72, %s74
      %p78 = scmp.eq.s32.totalorder %s17, 0
      %p79 = por %p77, %p78
      %p80 = scmp.ne.s32.totalorder %s72, %s74
      %p81 = scmp.eq.s32.totalorder %s22, 1
      %p82 = por %p80, %p81
      %p83 = scmp.ne.s32.totalorder %s74, %s75
      %p84 = scmp.eq.s32.totalorder %s22, 0
      %p85 = por %p83, %p84
      %p86 = scmp.ne.s32.totalorder %s74, %s75
      %p87 = scmp.eq.s32.totalorder %s23, 1
      %p88 = por %p86, %p87
      %p90 = scmp.ne.s32.totalorder %s75, %s89
      %p91 = scmp.eq.s32.totalorder %s23, 0
      %p92 = por %p90, %p91
      %s94 = sadd.s32 %s93, 1
      %p97 = scmp.eq.s32.totalorder %s17, 1
      %p98 = scmp.ne.s32.totalorder %s93, %s95
      %p99 = scmp.eq.s32.totalorder %s17, 0
      %p100 = por %p98, %p99
      %p101 = scmp.ne.s32.totalorder %s93, %s95
      %p102 = scmp.eq.s32.totalorder %s22, 1
      %p103 = por %p101, %p102
      %p104 = scmp.ne.s32.totalorder %s95, %s96
      %p105 = scmp.eq.s32.totalorder %s22, 0
      %p106 = por %p104, %p105
      %p107 = scmp.ne.s32.totalorder %s95, %s96
      %p108 = scmp.eq.s32.totalorder %s23, 1
      %p109 = por %p107, %p108
      %p111 = scmp.ne.s32.totalorder %s96, %s110
      %p112 = scmp.eq.s32.totalorder %s23, 0
      %p113 = por %p111, %p112
      %s114 = ssub.s32 %s17, %s24
      %p115 = scmp.eq.s32.totalorder %s114, 0
      %s117 = sadd.s32 %s116, 1
      %s118 = scalar_select %p115, %s116, %s117
      %p121 = pneg %p115
      %p122 = scmp.eq.s32.totalorder %s17, 1
      %p123 = por %p121, %p122
      %p124 = scmp.ne.s32.totalorder %s116, %s119
      %p125 = scmp.eq.s32.totalorder %s17, 0
      %p126 = por %p124, %p125
      %p127 = scmp.ne.s32.totalorder %s116, %s119
      %p128 = scmp.eq.s32.totalorder %s22, 1
      %p129 = por %p127, %p128
      %p130 = scmp.ne.s32.totalorder %s119, %s120
      %p131 = scmp.eq.s32.totalorder %s22, 0
      %p132 = por %p130, %p131
      %p133 = scmp.ne.s32.totalorder %s119, %s120
      %p134 = scmp.eq.s32.totalorder %s23, 1
      %p135 = por %p133, %p134
      %p137 = scmp.ne.s32.totalorder %s120, %s136
      %p138 = scmp.eq.s32.totalorder %s23, 0
      %p139 = por %p137, %p138
      %p140 = scmp.le.s32.totalorder 1, %s17
      %p141 = scmp.lt.s32.totalorder %s17, 3
      %p142 = pnand %p140, %p141
      %p143 = pneg %p142
      // Predicated region
      $region9: #{tpu_custom_call.1} parent=5 // pred_check
        _
      $region10: #{tpu_custom_call.1} parent=5 // pred_check_branch
        %145 = sbr.rel (%p142) target = $region12
      $region11: #{tpu_custom_call.1} parent=5 // pred_region
        %s146 = ssub.s32 %s17, 1
        // Predicated region
        $region13: #{tpu_custom_call.1} parent=11 // pred_check
          %p147 = pneg %p64
        $region14: #{tpu_custom_call.1} parent=11 // pred_check_branch
          %149 = sbr.rel (%p147) target = $region16
        $region15: #{tpu_custom_call.1} parent=11 // pred_region
          %s151 = ssub.s32 1024, 1024
          %152 = vsyncadd [#allocation6], %s151
          %s153 = sshll.u32 [#allocation5], 4
          %s154 = int_to_ptr.vmem [resolvable:$true] %s153
          %159 = dma.hbm_to_vmem [thread:$0]  %s1, 1024, %s154, [#allocation6], 128, 128, 8
        $region16: #{tpu_custom_call.1} parent=11 // pred_fallthru
          _
        // Predicated region
        $region17: #{tpu_custom_call.1} parent=11 // pred_check
          %p160 = pneg %p85
        $region18: #{tpu_custom_call.1} parent=11 // pred_check_branch
          %162 = sbr.rel (%p160) target = $region20
        $region19: #{tpu_custom_call.1} parent=11 // pred_region
          %s164 = ssub.s32 512, 512
          %165 = vsyncadd [#allocation6], %s164
          %s166 = sshll.u32 [#allocation7], 4
          %s167 = int_to_ptr.vmem [resolvable:$true] %s166
          %172 = dma.hbm_to_vmem [thread:$0]  %s2, 512, %s167, [#allocation6], 64, 64, 4
        $region20: #{tpu_custom_call.1} parent=11 // pred_fallthru
          _
        // Predicated region
        $region21: #{tpu_custom_call.1} parent=11 // pred_check
          %p173 = pneg %p106
        $region22: #{tpu_custom_call.1} parent=11 // pred_check_branch
          %175 = sbr.rel (%p173) target = $region24
        $region23: #{tpu_custom_call.1} parent=11 // pred_region
          _
        $region24: #{tpu_custom_call.1} parent=11 // pred_fallthru
          _
      $region12: #{tpu_custom_call.1} parent=5 // pred_fallthru
        _
      %p176 = scmp.lt.s32.totalorder %s17, 2
      // Predicated region
      $region25: #{tpu_custom_call.1} parent=5 // pred_check
        %p177 = pneg %p176
      $region26: #{tpu_custom_call.1} parent=5 // pred_check_branch
        %179 = sbr.rel (%p177) target = $region28
      $region27: #{tpu_custom_call.1} parent=5 // pred_region
        // Predicated region
        $region29: #{tpu_custom_call.1} parent=27 // pred_check
          %p180 = pneg %p37
        $region30: #{tpu_custom_call.1} parent=27 // pred_check_branch
          %182 = sbr.rel (%p180) target = $region32
        $region31: #{tpu_custom_call.1} parent=27 // pred_region
          %s183 = sand.u32 %s27, 1
          %s184 = scalar_lea.sflag [#allocation3], %s183
          %s185 = sand.u32 %s27, 1
          %s186 = smul.addr %s185, 8
          %s187 = scalar_lea.vmem [#allocation2], %s186
          %s189 = ssub.s32 128, 128
          %190 = vsyncadd %s184, %s189
          %s191 = smul.addr %s17, 128
          %s192 = scalar_lea.hbm %s0, %s191
          %s194 = sshll.u32 %s187, 4
          %s195 = int_to_ptr.vmem [resolvable:$true] %s194
          %197 = dma.hbm_to_vmem [thread:$0]  %s192, 128, %s195, %s184
        $region32: #{tpu_custom_call.1} parent=27 // pred_fallthru
          _
      $region28: #{tpu_custom_call.1} parent=5 // pred_fallthru
        _
      %p198 = scmp.le.s32.totalorder 1, %s17
      %p199 = scmp.lt.s32.totalorder %s17, 3
      %p200 = pnand %p198, %p199
      %p201 = pneg %p200
      // Predicated region
      $region33: #{tpu_custom_call.1} parent=5 // pred_check
        _
      $region34: #{tpu_custom_call.1} parent=5 // pred_check_branch
        %203 = sbr.rel (%p200) target = $region36
      $region35: #{tpu_custom_call.1} parent=5 // pred_region
        %s204 = ssub.s32 %s17, 1
        %s205 = sand.u32 %s30, 1
        %s206 = scalar_lea.sflag [#allocation3], %s205
        %s207 = sand.u32 %s30, 1
        %s208 = smul.addr %s207, 8
        %s209 = scalar_lea.vmem [#allocation2], %s208
        // Predicated region
        $region37: #{tpu_custom_call.1} parent=35 // pred_check
          %p210 = pneg %p43
        $region38: #{tpu_custom_call.1} parent=35 // pred_check_branch
          %212 = sbr.rel (%p210) target = $region40
        $region39: #{tpu_custom_call.1} parent=35 // pred_region
          %213 = dma.done %s206, 128
        $region40: #{tpu_custom_call.1} parent=35 // pred_fallthru
          _
        // Predicated region
        $region41: #{tpu_custom_call.1} parent=35 // pred_check
          %p214 = pneg %p64
        $region42: #{tpu_custom_call.1} parent=35 // pred_check_branch
          %216 = sbr.rel (%p214) target = $region44
        $region43: #{tpu_custom_call.1} parent=35 // pred_region
          %217 = dma.done [#allocation6], 1024
        $region44: #{tpu_custom_call.1} parent=35 // pred_fallthru
          _
        // Predicated region
        $region45: #{tpu_custom_call.1} parent=35 // pred_check
          %p218 = pneg %p85
        $region46: #{tpu_custom_call.1} parent=35 // pred_check_branch
          %220 = sbr.rel (%p218) target = $region48
        $region47: #{tpu_custom_call.1} parent=35 // pred_region
          %221 = dma.done [#allocation6], 512
        $region48: #{tpu_custom_call.1} parent=35 // pred_fallthru
          _
        %s222 = sand.u32 %s30, 1
        %s223 = scalar_lea.sflag [#allocation3], %s222
        %s224 = sand.u32 %s30, 1
        %s225 = smul.addr %s224, 8
        %s226 = scalar_lea.vmem [#allocation2], %s225
        %p227 = pneg %p43
        %p228 = pneg %p40
        %p229 = pneg %p64
        %p230 = pneg %p61
        %p231 = pneg %p85
        %p232 = pneg %p82
        %p233 = pneg %p106
        %p234 = pneg %p103
        %p235 = pneg %p132
        %p236 = pneg %p129
        %s237 = sand.u32 %s119, 1
        %s238 = scalar_lea.sflag [#allocation4], %s237
        %s239 = sand.u32 %s119, 1
        %s240 = smul.addr %s239, 8
        %s241 = scalar_lea.vmem [#allocation8], %s240
        %v243 = vld [vmem:[%s209] sm:$0xff]
        %v244 = vpack.c.bf16 %v243, %v243
        %v245 = vld [vmem:[#allocation5] sm:$0xff]
        %v246 = vld [vmem:[#allocation5 + $0x8] sm:$0xff]
        %v247 = vld [vmem:[#allocation5 + $0x10] sm:$0xff]
        %v248 = vld [vmem:[#allocation5 + $0x18] sm:$0xff]
        %v249 = vld [vmem:[#allocation5 + $0x20] sm:$0xff]
        %v250 = vld [vmem:[#allocation5 + $0x28] sm:$0xff]
        %v251 = vld [vmem:[#allocation5 + $0x30] sm:$0xff]
        %v252 = vld [vmem:[#allocation5 + $0x38] sm:$0xff]
        %v261 = vunpack.c.l.b16 %v245
        %v262 = vunpack.c.h.b16 %v245
        %v263 = vunpack.c.l.b16 %v246
        %v264 = vunpack.c.h.b16 %v246
        %v265 = vunpack.c.l.b16 %v247
        %v266 = vunpack.c.h.b16 %v247
        %v267 = vunpack.c.l.b16 %v248
        %v268 = vunpack.c.h.b16 %v248
        %v269 = vunpack.c.l.b16 %v249
        %v270 = vunpack.c.h.b16 %v249
        %v271 = vunpack.c.l.b16 %v250
        %v272 = vunpack.c.h.b16 %v250
        %v273 = vunpack.c.l.b16 %v251
        %v274 = vunpack.c.h.b16 %v251
        %v275 = vunpack.c.l.b16 %v252
        %v276 = vunpack.c.h.b16 %v252
        %v277 = vpack.c.b16 %v263, %v261
        %v278 = vpack.c.b16 %v264, %v262
        %v279 = vpack.c.b16 %v267, %v265
        %v280 = vpack.c.b16 %v268, %v266
        %v281 = vpack.c.b16 %v271, %v269
        %v282 = vpack.c.b16 %v272, %v270
        %v283 = vpack.c.b16 %v275, %v273
        %v284 = vpack.c.b16 %v276, %v274
        %vm293 = vcmask 523264
        %v295 = vsel %vm293, %v244, 0
        %297 = vmatprep.subr.bf16.mxu0 0
        %298 = vmatpush1.bf16.msra.mxu0 0
        %299 = vmatprep.subr.bf16.mxu0 0
        %300 = vmatpush1.bf16.msra.mxu0 0
        %301 = vmatprep.subr.bf16.mxu0 0
        %302 = vmatpush1.bf16.msra.mxu0 0
        %303 = vmatprep.subr.bf16.mxu0 0
        %304 = vmatpush1.bf16.msra.mxu0 0
        %305 = vmatprep.subr.bf16.mxu0 %v284
        %306 = vmatpush1.bf16.msra.mxu0 %v283
        %307 = vmatprep.subr.bf16.mxu0 %v282
        %308 = vmatpush1.bf16.msra.mxu0 %v281
        %309 = vmatprep.subr.bf16.mxu0 %v280
        %310 = vmatpush1.bf16.msra.mxu0 %v279
        %311 = vmatprep.subr.bf16.mxu0 %v278
        %312 = vmatpush1.bf16.msra.mxu0 %v277
        %313 = vmatprep.subr.bf16.mxu0 0
        %314 = vmatpush2.bf16.msra.mxu0 0
        %315 = vmatprep.subr.bf16.mxu0 0
        %316 = vmatpush2.bf16.msra.mxu0 0
        %317 = vmatprep.subr.bf16.mxu0 0
        %318 = vmatpush2.bf16.msra.mxu0 0
        %319 = vmatprep.subr.bf16.mxu0 0
        %320 = vmatpush2.bf16.msra.mxu0 0
        %321 = vmatprep.subr.bf16.mxu0 0
        %322 = vmatpush2.bf16.msra.mxu0 0
        %323 = vmatprep.subr.bf16.mxu0 0
        %324 = vmatpush2.bf16.msra.mxu0 0
        %325 = vmatprep.subr.bf16.mxu0 0
        %326 = vmatpush2.bf16.msra.mxu0 0
        %327 = vmatprep.subr.bf16.mxu0 0
        %328 = vmatpush2.bf16.msra.mxu0 0
        %329 = vmatprep.mubr.bf16.mxu0 0
        %330 = vmatmul.mubr.bf16.gmra.mxu0 %v295
        %v331 = vpop.f32.mrf.mxu0
        %v332 = vadd.f32 0.0, %v331
        %v333 = vpop.f32.mrf.mxu0
        %v334 = vadd.f32 0.0, %v333
        %v335 = vpop.f32.mrf.mxu0
        %v336 = vpop.f32.mrf.mxu0
        %337 = vdwg.mxu0
        %v338 = vpack.c.bf16 %v332, %v332
        %v339 = vpack.c.bf16 %v334, %v334
        %341 = vrot.lane.b32.xlu0 %v338, 112
        %v342 = vpop.permute.xlu0 %341
        %343 = vrot.lane.b32.xlu0 %v338, 96
        %v344 = vpop.permute.xlu0 %343
        %345 = vrot.lane.b32.xlu0 %v338, 80
        %v346 = vpop.permute.xlu0 %345
        %348 = vrot.lane.b32.xlu0 %v339, 112
        %v349 = vpop.permute.xlu0 %348
        %350 = vrot.lane.b32.xlu0 %v339, 96
        %v351 = vpop.permute.xlu0 %350
        %352 = vrot.lane.b32.xlu0 %v339, 80
        %v353 = vpop.permute.xlu0 %352
        %v354 = vlaneseq
        %v355 = vshrl.u32 %v354, 7
        %v356 = vlaneseq
        %v357 = vand.u32 %v356, 127
        %vm358 = vcmp.le.s32.totalorder %v357, %v355
        %v359 = vsel %vm358, 0.0, -1e+30
        %360 = vrot.lane.b32.xlu0 %v338, 64
        %v361 = vpop.permute.xlu0 %360
        %vm362 = vcmask 130048
        %v364 = vsel %vm362, %v338, 0
        %v367 = vsel %vm362, %v361, 0
        %369 = vmatprep.subr.bf16.mxu0 0
        %370 = vmatpush1.bf16.xpose.msra.mxu0 0
        %371 = vmatprep.subr.bf16.mxu0 0
        %372 = vmatpush1.bf16.xpose.msra.mxu0 0
        %373 = vmatprep.subr.bf16.mxu0 0
        %374 = vmatpush1.bf16.xpose.msra.mxu0 0
        %375 = vmatprep.subr.bf16.mxu0 0
        %376 = vmatpush1.bf16.xpose.msra.mxu0 0
        %377 = vmatprep.subr.bf16.mxu0 0
        %378 = vmatpush1.bf16.xpose.msra.mxu0 0
        %379 = vmatprep.subr.bf16.mxu0 0
        %380 = vmatpush1.bf16.xpose.msra.mxu0 0
        %381 = vmatprep.subr.bf16.mxu0 0
        %382 = vmatpush1.bf16.xpose.msra.mxu0 0
        %383 = vmatprep.subr.bf16.mxu0 0
        %384 = vmatpush1.bf16.xpose.msra.mxu0 %v367
        %385 = vmatprep.subr.bf16.mxu0 0
        %386 = vmatpush2.bf16.xpose.msra.mxu0 0
        %387 = vmatprep.subr.bf16.mxu0 0
        %388 = vmatpush2.bf16.xpose.msra.mxu0 0
        %389 = vmatprep.subr.bf16.mxu0 0
        %390 = vmatpush2.bf16.xpose.msra.mxu0 0
        %391 = vmatprep.subr.bf16.mxu0 0
        %392 = vmatpush2.bf16.xpose.msra.mxu0 0
        %393 = vmatprep.subr.bf16.mxu0 0
        %394 = vmatpush2.bf16.xpose.msra.mxu0 0
        %395 = vmatprep.subr.bf16.mxu0 0
        %396 = vmatpush2.bf16.xpose.msra.mxu0 0
        %397 = vmatprep.subr.bf16.mxu0 0
        %398 = vmatpush2.bf16.xpose.msra.mxu0 0
        %399 = vmatprep.subr.bf16.mxu0 0
        %400 = vmatpush2.bf16.xpose.msra.mxu0 0
        %401 = vmatprep.mubr.bf16.mxu0 0
        %402 = vmatmul.mubr.bf16.gmra.mxu0 %v364
        %v403 = vpop.f32.mrf.mxu0
        %v404 = vadd.f32 %v359, %v403
        %v405 = vpop.f32.mrf.mxu0
        %v406 = vpop.f32.mrf.mxu0
        %v407 = vpop.f32.mrf.mxu0
        %408 = vdwg.mxu0
        %409 = vrot.lane.b32.xlu0 %v342, 64
        %v410 = vpop.permute.xlu0 %409
        %v412 = vsel %vm362, %v342, 0
        %v415 = vsel %vm362, %v410, 0
        %417 = vmatprep.subr.bf16.mxu0 0
        %418 = vmatpush1.bf16.xpose.msra.mxu0 0
        %419 = vmatprep.subr.bf16.mxu0 0
        %420 = vmatpush1.bf16.xpose.msra.mxu0 0
        %421 = vmatprep.subr.bf16.mxu0 0
        %422 = vmatpush1.bf16.xpose.msra.mxu0 0
        %423 = vmatprep.subr.bf16.mxu0 0
        %424 = vmatpush1.bf16.xpose.msra.mxu0 0
        %425 = vmatprep.subr.bf16.mxu0 0
        %426 = vmatpush1.bf16.xpose.msra.mxu0 0
        %427 = vmatprep.subr.bf16.mxu0 0
        %428 = vmatpush1.bf16.xpose.msra.mxu0 0
        %429 = vmatprep.subr.bf16.mxu0 0
        %430 = vmatpush1.bf16.xpose.msra.mxu0 0
        %431 = vmatprep.subr.bf16.mxu0 0
        %432 = vmatpush1.bf16.xpose.msra.mxu0 %v415
        %433 = vmatprep.subr.bf16.mxu0 0
        %434 = vmatpush2.bf16.xpose.msra.mxu0 0
        %435 = vmatprep.subr.bf16.mxu0 0
        %436 = vmatpush2.bf16.xpose.msra.mxu0 0
        %437 = vmatprep.subr.bf16.mxu0 0
        %438 = vmatpush2.bf16.xpose.msra.mxu0 0
        %439 = vmatprep.subr.bf16.mxu0 0
        %440 = vmatpush2.bf16.xpose.msra.mxu0 0
        %441 = vmatprep.subr.bf16.mxu0 0
        %442 = vmatpush2.bf16.xpose.msra.mxu0 0
        %443 = vmatprep.subr.bf16.mxu0 0
        %444 = vmatpush2.bf16.xpose.msra.mxu0 0
        %445 = vmatprep.subr.bf16.mxu0 0
        %446 = vmatpush2.bf16.xpose.msra.mxu0 0
        %447 = vmatprep.subr.bf16.mxu0 0
        %448 = vmatpush2.bf16.xpose.msra.mxu0 0
        %449 = vmatprep.mubr.bf16.mxu0 0
        %450 = vmatmul.mubr.bf16.gmra.mxu0 %v412
        %v451 = vpop.f32.mrf.mxu0
        %v452 = vadd.f32 %v359, %v451
        %v453 = vpop.f32.mrf.mxu0
        %v454 = vpop.f32.mrf.mxu0
        %v455 = vpop.f32.mrf.mxu0
        %456 = vdwg.mxu0
        %457 = vrot.lane.b32.xlu0 %v344, 64
        %v458 = vpop.permute.xlu0 %457
        %v460 = vsel %vm362, %v344, 0
        %v463 = vsel %vm362, %v458, 0
        %465 = vmatprep.subr.bf16.mxu0 0
        %466 = vmatpush1.bf16.xpose.msra.mxu0 0
        %467 = vmatprep.subr.bf16.mxu0 0
        %468 = vmatpush1.bf16.xpose.msra.mxu0 0
        %469 = vmatprep.subr.bf16.mxu0 0
        %470 = vmatpush1.bf16.xpose.msra.mxu0 0
        %471 = vmatprep.subr.bf16.mxu0 0
        %472 = vmatpush1.bf16.xpose.msra.mxu0 0
        %473 = vmatprep.subr.bf16.mxu0 0
        %474 = vmatpush1.bf16.xpose.msra.mxu0 0
        %475 = vmatprep.subr.bf16.mxu0 0
        %476 = vmatpush1.bf16.xpose.msra.mxu0 0
        %477 = vmatprep.subr.bf16.mxu0 0
        %478 = vmatpush1.bf16.xpose.msra.mxu0 0
        %479 = vmatprep.subr.bf16.mxu0 0
        %480 = vmatpush1.bf16.xpose.msra.mxu0 %v463
        %481 = vmatprep.subr.bf16.mxu0 0
        %482 = vmatpush2.bf16.xpose.msra.mxu0 0
        %483 = vmatprep.subr.bf16.mxu0 0
        %484 = vmatpush2.bf16.xpose.msra.mxu0 0
        %485 = vmatprep.subr.bf16.mxu0 0
        %486 = vmatpush2.bf16.xpose.msra.mxu0 0
        %487 = vmatprep.subr.bf16.mxu0 0
        %488 = vmatpush2.bf16.xpose.msra.mxu0 0
        %489 = vmatprep.subr.bf16.mxu0 0
        %490 = vmatpush2.bf16.xpose.msra.mxu0 0
        %491 = vmatprep.subr.bf16.mxu0 0
        %492 = vmatpush2.bf16.xpose.msra.mxu0 0
        %493 = vmatprep.subr.bf16.mxu0 0
        %494 = vmatpush2.bf16.xpose.msra.mxu0 0
        %495 = vmatprep.subr.bf16.mxu0 0
        %496 = vmatpush2.bf16.xpose.msra.mxu0 0
        %497 = vmatprep.mubr.bf16.mxu0 0
        %498 = vmatmul.mubr.bf16.gmra.mxu0 %v460
        %v499 = vpop.f32.mrf.mxu0
        %v500 = vadd.f32 %v359, %v499
        %v501 = vpop.f32.mrf.mxu0
        %v502 = vpop.f32.mrf.mxu0
        %v503 = vpop.f32.mrf.mxu0
        %504 = vdwg.mxu0
        %505 = vrot.lane.b32.xlu0 %v346, 64
        %v506 = vpop.permute.xlu0 %505
        %v508 = vsel %vm362, %v346, 0
        %v511 = vsel %vm362, %v506, 0
        %513 = vmatprep.subr.bf16.mxu0 0
        %514 = vmatpush1.bf16.xpose.msra.mxu0 0
        %515 = vmatprep.subr.bf16.mxu0 0
        %516 = vmatpush1.bf16.xpose.msra.mxu0 0
        %517 = vmatprep.subr.bf16.mxu0 0
        %518 = vmatpush1.bf16.xpose.msra.mxu0 0
        %519 = vmatprep.subr.bf16.mxu0 0
        %520 = vmatpush1.bf16.xpose.msra.mxu0 0
        %521 = vmatprep.subr.bf16.mxu0 0
        %522 = vmatpush1.bf16.xpose.msra.mxu0 0
        %523 = vmatprep.subr.bf16.mxu0 0
        %524 = vmatpush1.bf16.xpose.msra.mxu0 0
        %525 = vmatprep.subr.bf16.mxu0 0
        %526 = vmatpush1.bf16.xpose.msra.mxu0 0
        %527 = vmatprep.subr.bf16.mxu0 0
        %528 = vmatpush1.bf16.xpose.msra.mxu0 %v511
        %529 = vmatprep.subr.bf16.mxu0 0
        %530 = vmatpush2.bf16.xpose.msra.mxu0 0
        %531 = vmatprep.subr.bf16.mxu0 0
        %532 = vmatpush2.bf16.xpose.msra.mxu0 0
        %533 = vmatprep.subr.bf16.mxu0 0
        %534 = vmatpush2.bf16.xpose.msra.mxu0 0
        %535 = vmatprep.subr.bf16.mxu0 0
        %536 = vmatpush2.bf16.xpose.msra.mxu0 0
        %537 = vmatprep.subr.bf16.mxu0 0
        %538 = vmatpush2.bf16.xpose.msra.mxu0 0
        %539 = vmatprep.subr.bf16.mxu0 0
        %540 = vmatpush2.bf16.xpose.msra.mxu0 0
        %541 = vmatprep.subr.bf16.mxu0 0
        %542 = vmatpush2.bf16.xpose.msra.mxu0 0
        %543 = vmatprep.subr.bf16.mxu0 0
        %544 = vmatpush2.bf16.xpose.msra.mxu0 0
        %545 = vmatprep.mubr.bf16.mxu0 0
        %546 = vmatmul.mubr.bf16.gmra.mxu0 %v508
        %v547 = vpop.f32.mrf.mxu0
        %v548 = vadd.f32 %v359, %v547
        %v549 = vpop.f32.mrf.mxu0
        %v550 = vpop.f32.mrf.mxu0
        %v551 = vpop.f32.mrf.mxu0
        %552 = vdwg.mxu0
        %vm553 = vcmask 64512
        %v554 = vsel %vm553, %v404, -inf
        %555 = vmax.xlane.f32.xlu0 %v554
        %v556 = vpop.xlane.xlu0 %555
        %v557 = vsel %vm553, %v452, -inf
        %558 = vmax.xlane.f32.xlu0 %v557
        %v559 = vpop.xlane.xlu0 %558
        %v560 = vsel %vm553, %v500, -inf
        %561 = vmax.xlane.f32.xlu0 %v560
        %v562 = vpop.xlane.xlu0 %561
        %v563 = vsel %vm553, %v548, -inf
        %564 = vmax.xlane.f32.xlu0 %v563
        %v565 = vpop.xlane.xlu0 %564
        %v566 = vsub.f32 %v404, %v556
        %v567 = vsub.f32 %v452, %v559
        %v568 = vsub.f32 %v500, %v562
        %v569 = vsub.f32 %v548, %v565
        %v570 = vmul.f32 %v566, 1.442695
        %v571 = vpow.pop %v570
        %v572 = vmul.f32 %v567, 1.442695
        %v573 = vpow.pop %v572
        %v574 = vmul.f32 %v568, 1.442695
        %v575 = vpow.pop %v574
        %v576 = vmul.f32 %v569, 1.442695
        %v577 = vpow.pop %v576
        %v578 = vsel %vm553, %v571, 0.0
        %579 = vadd.xlane.f32.xlu0 %v578
        %v580 = vpop.xlane.xlu0 %579
        %v581 = vsel %vm553, %v573, 0.0
        %582 = vadd.xlane.f32.xlu0 %v581
        %v583 = vpop.xlane.xlu0 %582
        %v584 = vsel %vm553, %v575, 0.0
        %585 = vadd.xlane.f32.xlu0 %v584
        %v586 = vpop.xlane.xlu0 %585
        %v587 = vsel %vm553, %v577, 0.0
        %588 = vadd.xlane.f32.xlu0 %v587
        %v589 = vpop.xlane.xlu0 %588
        %v590 = vrcp.pop %v580
        %v591 = vrcp.pop %v583
        %v592 = vrcp.pop %v586
        %v593 = vrcp.pop %v589
        %v594 = vmul.f32 %v571, %v590
        %v595 = vmul.f32 %v573, %v591
        %v596 = vmul.f32 %v575, %v592
        %v597 = vmul.f32 %v577, %v593
        %v598 = vpack.c.bf16 %v594, %v594
        %v599 = vpack.c.bf16 %v595, %v595
        %v600 = vpack.c.bf16 %v596, %v596
        %v601 = vpack.c.bf16 %v597, %v597
        %v603 = vsel %vm553, %v598, 0
        %vm605 = vcmask 1043456
        %v607 = vsel %vm605, %v339, 0
        %609 = vmatprep.subr.bf16.mxu0 0
        %610 = vmatpush1.bf16.msra.mxu0 0
        %611 = vmatprep.subr.bf16.mxu0 0
        %612 = vmatpush1.bf16.msra.mxu0 0
        %613 = vmatprep.subr.bf16.mxu0 0
        %614 = vmatpush1.bf16.msra.mxu0 0
        %615 = vmatprep.subr.bf16.mxu0 0
        %616 = vmatpush1.bf16.msra.mxu0 0
        %617 = vmatprep.subr.bf16.mxu0 0
        %618 = vmatpush1.bf16.msra.mxu0 0
        %619 = vmatprep.subr.bf16.mxu0 0
        %620 = vmatpush1.bf16.msra.mxu0 0
        %621 = vmatprep.subr.bf16.mxu0 0
        %622 = vmatpush1.bf16.msra.mxu0 0
        %623 = vmatprep.subr.bf16.mxu0 0
        %624 = vmatpush1.bf16.msra.mxu0 %v607
        %625 = vmatprep.subr.bf16.mxu0 0
        %626 = vmatpush2.bf16.msra.mxu0 0
        %627 = vmatprep.subr.bf16.mxu0 0
        %628 = vmatpush2.bf16.msra.mxu0 0
        %629 = vmatprep.subr.bf16.mxu0 0
        %630 = vmatpush2.bf16.msra.mxu0 0
        %631 = vmatprep.subr.bf16.mxu0 0
        %632 = vmatpush2.bf16.msra.mxu0 0
        %633 = vmatprep.subr.bf16.mxu0 0
        %634 = vmatpush2.bf16.msra.mxu0 0
        %635 = vmatprep.subr.bf16.mxu0 0
        %636 = vmatpush2.bf16.msra.mxu0 0
        %637 = vmatprep.subr.bf16.mxu0 0
        %638 = vmatpush2.bf16.msra.mxu0 0
        %639 = vmatprep.subr.bf16.mxu0 0
        %640 = vmatpush2.bf16.msra.mxu0 0
        %641 = vmatprep.mubr.bf16.mxu0 0
        %642 = vmatmul.mubr.bf16.gmra.mxu0 %v603
        %v643 = vpop.f32.mrf.mxu0
        %v644 = vadd.f32 0.0, %v643
        %v645 = vpop.f32.mrf.mxu0
        %v646 = vpop.f32.mrf.mxu0
        %v647 = vpop.f32.mrf.mxu0
        %648 = vdwg.mxu0
        %v650 = vsel %vm553, %v599, 0
        %v653 = vsel %vm605, %v349, 0
        %655 = vmatprep.subr.bf16.mxu0 0
        %656 = vmatpush1.bf16.msra.mxu0 0
        %657 = vmatprep.subr.bf16.mxu0 0
        %658 = vmatpush1.bf16.msra.mxu0 0
        %659 = vmatprep.subr.bf16.mxu0 0
        %660 = vmatpush1.bf16.msra.mxu0 0
        %661 = vmatprep.subr.bf16.mxu0 0
        %662 = vmatpush1.bf16.msra.mxu0 0
        %663 = vmatprep.subr.bf16.mxu0 0
        %664 = vmatpush1.bf16.msra.mxu0 0
        %665 = vmatprep.subr.bf16.mxu0 0
        %666 = vmatpush1.bf16.msra.mxu0 0
        %667 = vmatprep.subr.bf16.mxu0 0
        %668 = vmatpush1.bf16.msra.mxu0 0
        %669 = vmatprep.subr.bf16.mxu0 0
        %670 = vmatpush1.bf16.msra.mxu0 %v653
        %671 = vmatprep.subr.bf16.mxu0 0
        %672 = vmatpush2.bf16.msra.mxu0 0
        %673 = vmatprep.subr.bf16.mxu0 0
        %674 = vmatpush2.bf16.msra.mxu0 0
        %675 = vmatprep.subr.bf16.mxu0 0
        %676 = vmatpush2.bf16.msra.mxu0 0
        %677 = vmatprep.subr.bf16.mxu0 0
        %678 = vmatpush2.bf16.msra.mxu0 0
        %679 = vmatprep.subr.bf16.mxu0 0
        %680 = vmatpush2.bf16.msra.mxu0 0
        %681 = vmatprep.subr.bf16.mxu0 0
        %682 = vmatpush2.bf16.msra.mxu0 0
        %683 = vmatprep.subr.bf16.mxu0 0
        %684 = vmatpush2.bf16.msra.mxu0 0
        %685 = vmatprep.subr.bf16.mxu0 0
        %686 = vmatpush2.bf16.msra.mxu0 0
        %687 = vmatprep.mubr.bf16.mxu0 0
        %688 = vmatmul.mubr.bf16.gmra.mxu0 %v650
        %v689 = vpop.f32.mrf.mxu0
        %v690 = vadd.f32 0.0, %v689
        %v691 = vpop.f32.mrf.mxu0
        %v692 = vpop.f32.mrf.mxu0
        %v693 = vpop.f32.mrf.mxu0
        %694 = vdwg.mxu0
        %v696 = vsel %vm553, %v600, 0
        %v699 = vsel %vm605, %v351, 0
        %701 = vmatprep.subr.bf16.mxu0 0
        %702 = vmatpush1.bf16.msra.mxu0 0
        %703 = vmatprep.subr.bf16.mxu0 0
        %704 = vmatpush1.bf16.msra.mxu0 0
        %705 = vmatprep.subr.bf16.mxu0 0
        %706 = vmatpush1.bf16.msra.mxu0 0
        %707 = vmatprep.subr.bf16.mxu0 0
        %708 = vmatpush1.bf16.msra.mxu0 0
        %709 = vmatprep.subr.bf16.mxu0 0
        %710 = vmatpush1.bf16.msra.mxu0 0
        %711 = vmatprep.subr.bf16.mxu0 0
        %712 = vmatpush1.bf16.msra.mxu0 0
        %713 = vmatprep.subr.bf16.mxu0 0
        %714 = vmatpush1.bf16.msra.mxu0 0
        %715 = vmatprep.subr.bf16.mxu0 0
        %716 = vmatpush1.bf16.msra.mxu0 %v699
        %717 = vmatprep.subr.bf16.mxu0 0
        %718 = vmatpush2.bf16.msra.mxu0 0
        %719 = vmatprep.subr.bf16.mxu0 0
        %720 = vmatpush2.bf16.msra.mxu0 0
        %721 = vmatprep.subr.bf16.mxu0 0
        %722 = vmatpush2.bf16.msra.mxu0 0
        %723 = vmatprep.subr.bf16.mxu0 0
        %724 = vmatpush2.bf16.msra.mxu0 0
        %725 = vmatprep.subr.bf16.mxu0 0
        %726 = vmatpush2.bf16.msra.mxu0 0
        %727 = vmatprep.subr.bf16.mxu0 0
        %728 = vmatpush2.bf16.msra.mxu0 0
        %729 = vmatprep.subr.bf16.mxu0 0
        %730 = vmatpush2.bf16.msra.mxu0 0
        %731 = vmatprep.subr.bf16.mxu0 0
        %732 = vmatpush2.bf16.msra.mxu0 0
        %733 = vmatprep.mubr.bf16.mxu0 0
        %734 = vmatmul.mubr.bf16.gmra.mxu0 %v696
        %v735 = vpop.f32.mrf.mxu0
        %v736 = vadd.f32 0.0, %v735
        %v737 = vpop.f32.mrf.mxu0
        %v738 = vpop.f32.mrf.mxu0
        %v739 = vpop.f32.mrf.mxu0
        %740 = vdwg.mxu0
        %v742 = vsel %vm553, %v601, 0
        %v745 = vsel %vm605, %v353, 0
        %747 = vmatprep.subr.bf16.mxu0 0
        %748 = vmatpush1.bf16.msra.mxu0 0
        %749 = vmatprep.subr.bf16.mxu0 0
        %750 = vmatpush1.bf16.msra.mxu0 0
        %751 = vmatprep.subr.bf16.mxu0 0
        %752 = vmatpush1.bf16.msra.mxu0 0
        %753 = vmatprep.subr.bf16.mxu0 0
        %754 = vmatpush1.bf16.msra.mxu0 0
        %755 = vmatprep.subr.bf16.mxu0 0
        %756 = vmatpush1.bf16.msra.mxu0 0
        %757 = vmatprep.subr.bf16.mxu0 0
        %758 = vmatpush1.bf16.msra.mxu0 0
        %759 = vmatprep.subr.bf16.mxu0 0
        %760 = vmatpush1.bf16.msra.mxu0 0
        %761 = vmatprep.subr.bf16.mxu0 0
        %762 = vmatpush1.bf16.msra.mxu0 %v745
        %763 = vmatprep.subr.bf16.mxu0 0
        %764 = vmatpush2.bf16.msra.mxu0 0
        %765 = vmatprep.subr.bf16.mxu0 0
        %766 = vmatpush2.bf16.msra.mxu0 0
        %767 = vmatprep.subr.bf16.mxu0 0
        %768 = vmatpush2.bf16.msra.mxu0 0
        %769 = vmatprep.subr.bf16.mxu0 0
        %770 = vmatpush2.bf16.msra.mxu0 0
        %771 = vmatprep.subr.bf16.mxu0 0
        %772 = vmatpush2.bf16.msra.mxu0 0
        %773 = vmatprep.subr.bf16.mxu0 0
        %774 = vmatpush2.bf16.msra.mxu0 0
        %775 = vmatprep.subr.bf16.mxu0 0
        %776 = vmatpush2.bf16.msra.mxu0 0
        %777 = vmatprep.subr.bf16.mxu0 0
        %778 = vmatpush2.bf16.msra.mxu0 0
        %779 = vmatprep.mubr.bf16.mxu0 0
        %780 = vmatmul.mubr.bf16.gmra.mxu0 %v742
        %v781 = vpop.f32.mrf.mxu0
        %v782 = vadd.f32 0.0, %v781
        %v783 = vpop.f32.mrf.mxu0
        %v784 = vpop.f32.mrf.mxu0
        %v785 = vpop.f32.mrf.mxu0
        %786 = vdwg.mxu0
        %v787 = vpack.c.bf16 %v644, %v644
        %v788 = vpack.c.bf16 %v690, %v690
        %v789 = vpack.c.bf16 %v736, %v736
        %v790 = vpack.c.bf16 %v782, %v782
        %792 = vrot.lane.b32.xlu0 %v788, 16
        %v793 = vpop.permute.xlu0 %792
        %795 = vrot.lane.b32.xlu0 %v789, 32
        %v796 = vpop.permute.xlu0 %795
        %798 = vrot.lane.b32.xlu0 %v790, 48
        %v799 = vpop.permute.xlu0 %798
        %v802 = vsel %vm362, %v787, %v793
        %vm803 = vcmask 261120
        %v805 = vsel %vm803, %v802, %v796
        %vm806 = vcmask 392192
        %v808 = vsel %vm806, %v805, %v799
        %v809 = vld [vmem:[#allocation7] sm:$0xf]
        %v810 = vld [vmem:[#allocation7 + $0x4] sm:$0xf]
        %v811 = vld [vmem:[#allocation7 + $0x8] sm:$0xf]
        %v812 = vld [vmem:[#allocation7 + $0xc] sm:$0xf]
        %v813 = vld [vmem:[#allocation7 + $0x10] sm:$0xf]
        %v814 = vld [vmem:[#allocation7 + $0x14] sm:$0xf]
        %v815 = vld [vmem:[#allocation7 + $0x18] sm:$0xf]
        %v816 = vld [vmem:[#allocation7 + $0x1c] sm:$0xf]
        %v817 = vld [vmem:[%s3] sm:$0x1]
        %v819 = vlaneseq
        %v820 = vshrl.u32 %v819, 7
        %v821 = vsub.s32 0, %v820
        %v822 = vrot.slane %v817, %v821
        %v832 = vunpack.c.l.b16 %v809
        %v833 = vunpack.c.l.b16 %v810
        %v834 = vunpack.c.l.b16 %v811
        %v835 = vunpack.c.l.b16 %v812
        %v836 = vunpack.c.l.b16 %v813
        %v837 = vunpack.c.l.b16 %v814
        %v838 = vunpack.c.l.b16 %v815
        %v839 = vunpack.c.l.b16 %v816
        %v840 = vpack.c.b16 %v833, %v832
        %v841 = vpack.c.b16 %v835, %v834
        %v842 = vpack.c.b16 %v837, %v836
        %v843 = vpack.c.b16 %v839, %v838
        %v848 = vsel %vm293, %v808, 0
        %850 = vmatprep.subr.bf16.mxu0 0
        %851 = vmatpush1.bf16.msra.mxu0 0
        %852 = vmatprep.subr.bf16.mxu0 0
        %853 = vmatpush1.bf16.msra.mxu0 0
        %854 = vmatprep.subr.bf16.mxu0 0
        %855 = vmatpush1.bf16.msra.mxu0 0
        %856 = vmatprep.subr.bf16.mxu0 0
        %857 = vmatpush1.bf16.msra.mxu0 0
        %858 = vmatprep.subr.bf16.mxu0 0
        %859 = vmatpush1.bf16.msra.mxu0 %v843
        %860 = vmatprep.subr.bf16.mxu0 0
        %861 = vmatpush1.bf16.msra.mxu0 %v842
        %862 = vmatprep.subr.bf16.mxu0 0
        %863 = vmatpush1.bf16.msra.mxu0 %v841
        %864 = vmatprep.subr.bf16.mxu0 0
        %865 = vmatpush1.bf16.msra.mxu0 %v840
        %866 = vmatprep.subr.bf16.mxu0 0
        %867 = vmatpush2.bf16.msra.mxu0 0
        %868 = vmatprep.subr.bf16.mxu0 0
        %869 = vmatpush2.bf16.msra.mxu0 0
        %870 = vmatprep.subr.bf16.mxu0 0
        %871 = vmatpush2.bf16.msra.mxu0 0
        %872 = vmatprep.subr.bf16.mxu0 0
        %873 = vmatpush2.bf16.msra.mxu0 0
        %874 = vmatprep.subr.bf16.mxu0 0
        %875 = vmatpush2.bf16.msra.mxu0 0
        %876 = vmatprep.subr.bf16.mxu0 0
        %877 = vmatpush2.bf16.msra.mxu0 0
        %878 = vmatprep.subr.bf16.mxu0 0
        %879 = vmatpush2.bf16.msra.mxu0 0
        %880 = vmatprep.subr.bf16.mxu0 0
        %881 = vmatpush2.bf16.msra.mxu0 0
        %882 = vmatprep.mubr.bf16.mxu0 0
        %883 = vmatmul.mubr.bf16.gmra.mxu0 %v848
        %v884 = vpop.f32.mrf.mxu0
        %v885 = vadd.f32 %v822, %v884
        %v886 = vpop.f32.mrf.mxu0
        %v887 = vpop.f32.mrf.mxu0
        %v888 = vpop.f32.mrf.mxu0
        %889 = vdwg.mxu0
        %890 = vst.msk [vmem:[%s241] sm:$0xff] %vm293, %v885
        %s891 = sand.u32 %s119, 1
        %s892 = scalar_lea.sflag [#allocation4], %s891
        %s893 = sand.u32 %s119, 1
        %s894 = smul.addr %s893, 8
        %s895 = scalar_lea.vmem [#allocation8], %s894
        // Predicated region
        $region49: #{tpu_custom_call.1} parent=35 // pred_check
          %p896 = pneg %p129
        $region50: #{tpu_custom_call.1} parent=35 // pred_check_branch
          %898 = sbr.rel (%p896) target = $region52
        $region51: #{tpu_custom_call.1} parent=35 // pred_region
          %s900 = ssub.s32 128, 128
          %901 = vsyncadd %s892, %s900
          %s902 = smul.addr %s22, 128
          %s903 = scalar_lea.hbm %s4, %s902
          %s905 = sshll.u32 %s895, 4
          %s906 = int_to_ptr.vmem [resolvable:$true] %s905
          %908 = dma.vmem_to_hbm [thread:$0]  %s906, 128, %s903, %s892
        $region52: #{tpu_custom_call.1} parent=35 // pred_fallthru
          _
      $region36: #{tpu_custom_call.1} parent=5 // pred_fallthru
        _
      %p909 = scmp.le.s32.totalorder 2, %s17
      // Predicated region
      $region53: #{tpu_custom_call.1} parent=5 // pred_check
        %p910 = pneg %p909
      $region54: #{tpu_custom_call.1} parent=5 // pred_check_branch
        %912 = sbr.rel (%p910) target = $region56
      $region55: #{tpu_custom_call.1} parent=5 // pred_region
        %s913 = ssub.s32 %s17, 2
        // Predicated region
        $region57: #{tpu_custom_call.1} parent=55 // pred_check
          %p914 = pneg %p135
        $region58: #{tpu_custom_call.1} parent=55 // pred_check_branch
          %916 = sbr.rel (%p914) target = $region60
        $region59: #{tpu_custom_call.1} parent=55 // pred_region
          %s917 = sand.u32 %s120, 1
          %s918 = scalar_lea.sflag [#allocation4], %s917
          %s919 = sand.u32 %s120, 1
          %s920 = smul.addr %s919, 8
          %s921 = scalar_lea.vmem [#allocation8], %s920
          %922 = dma.done %s918, 128
        $region60: #{tpu_custom_call.1} parent=55 // pred_fallthru
          _
      $region56: #{tpu_custom_call.1} parent=5 // pred_fallthru
        _
    $region6: #{tpu_custom_call.1} parent=1 // loop_footer
      %s21 = sadd.s32 1, %s17
    $region7: #{tpu_custom_call.1} parent=1 // loop_footer_branch
      %16 = sbr.rel target = $region3
    $region8: #{tpu_custom_call.1} parent=1 // loop_exit
      _
    %923 = vsyncpa [#allocation3], 1
    %s924 = scalar_lea.sflag [#allocation3], 1
    %925 = vsyncpa %s924, 1
    %926 = vsyncpa [#allocation6], 1
    %927 = vsyncpa [#allocation4], 1
    %s928 = scalar_lea.sflag [#allocation4], 1
    %929 = vsyncpa %s928, 1

</llo_original>
